<compile_context>
chip_gen: v7x
topology: tpu7x:2x2x1
jax: 0.10.0
libtpu: 0.0.40
codegen_flags: <defaults>
</compile_context>

<pallas_src>
import jax
import jax.numpy as jnp
from jax import lax
from jax.experimental import pallas as pl
from jax.experimental.pallas import tpu as pltpu


def bilstm_forward(xe, params):
    """xe: (T, B, D) float32 embedded input (dropout layers are identity)."""
    T, B, D = xe.shape
    H2 = params["w_hh_fused"].shape[0] // 2   # 2H  (fwd | bwd) carry width
    H8 = params["w_hh_fused"].shape[1]        # 8H  fused gate width
    C = params["w_out_ext"].shape[1]
    Bp = 8                                    # pad batch to one f32 sublane group

    # Forward direction consumes x_t, backward consumes x_{T-1-t}: stack them on
    # the feature axis so one matmul produces both directions' input gates.
    x_cat = jnp.concatenate([xe, xe[::-1]], axis=-1)            # (T, B, 2D)
    x_cat = jnp.pad(x_cat, ((0, 0), (0, Bp - B), (0, 0)))       # (T, Bp, 2D)
    x_cat = x_cat.reshape(T * Bp, 2 * D).astype(jnp.bfloat16)   # (T*Bp, 2D)

    def kernel(x_ref, win_ref, whh_ref, b_ref, wout_ref, bout_ref, out_ref):
        # 1) Hoisted input projection for BOTH directions in a single matmul,
        #    kept live in vregs (16 vregs) instead of a VMEM scratch.
        gx = (jnp.dot(x_ref[...], win_ref[...],
                      preferred_element_type=jnp.float32)
              + b_ref[...])                                     # (T*Bp, 8H) f32

        # TODO(synk): optionally pin whh in the MXU weight registers across the
        # T steps via pltpu.matmul_push_rhs/_acc_lhs/_pop; relying on Mosaic here.
        whh = whh_ref[...]                                      # (2*H2, 8H) bf16

        # Hoisted constant masks.  Gate lane layout: [ i | f | g | o ], each H2
        # lanes wide (fwd half then bwd half inside each gate block).
        lane8 = lax.broadcasted_iota(jnp.int32, (Bp, H8), 1)
        g_mask = (lane8 >= 2 * H2) & (lane8 < 3 * H2)           # tanh (cell) lanes
        lane2 = lax.broadcasted_iota(jnp.int32, (Bp, 2 * H2), 1)
        c_mask = lane2 < H2                                     # low half of state = c

        # State S = [ c | h ] (128 lanes); mx tracks the running max (h half used).
        S = jnp.zeros((Bp, 2 * H2), jnp.float32)
        mx = jnp.full((Bp, 2 * H2), -jnp.inf, jnp.float32)

        for t in range(T):                   # static unroll, static aligned slices
            gates = gx[t * Bp:(t + 1) * Bp, :] + jnp.dot(
                S.astype(whh.dtype), whh, preferred_element_type=jnp.float32)
            # Single-tanh activations: i/f/o columns were prescaled by 0.5 in the
            # fused weights, so sigmoid(z) == 0.5*tanh(z/2) + 0.5 exactly.
            tg = jnp.tanh(gates)                                # one EUP pass, 8H wide
            act = jnp.where(g_mask, tg, 0.5 * tg + 0.5)         # [ i | f | g | o ]

            A = act[:, :2 * H2]                                 # [ i | f ] (128-aligned)
            Bg = act[:, 2 * H2:]                                # [ g | o ] (128-aligned)
            A_sw = pltpu.roll(A, shift=H2, axis=1)              # [ f | i ]   (XLU)
            cc = A * Bg + A_sw * S           # low half: i*g + f*c = c_new (hi = junk)
            tc = jnp.tanh(cc)                # low half: tanh(c_new)
            hh = Bg * pltpu.roll(tc, shift=H2, axis=1)          # high half: o*tanh(c_new)
            S = jnp.where(c_mask, cc, hh)                       # [ c_new | h_new ]
            # tanh is monotone: max_t tanh(h_t) == tanh(max_t h_t), so track h.
            mx = jnp.maximum(mx, S)

        # Reference: tanh -> max_pool1d over T -> tanh == tanh(tanh(max_t h)).
        # The c half of `pooled` is killed by the zero rows of w_out_ext.
        pooled = jnp.tanh(jnp.tanh(mx))                         # (Bp, 2*H2)
        out_ref[...] = (jnp.dot(pooled.astype(jnp.bfloat16), wout_ref[...],
                                preferred_element_type=jnp.float32)
                        + bout_ref[...])                        # (Bp, C)

    # NOTE: at serving-scale batch, add a batch grid axis (dimension_semantics=
    # ("parallel",)) and a (Bp_tile, ...) BlockSpec so v7x's two TensorCores /
    # smaller VMEM are used; at B=2 the whole kernel is ~0.2 MiB and gridless.
    vmem = pl.BlockSpec(memory_space=pltpu.MemorySpace.VMEM)
    out = pl.pallas_call(
        kernel,
        out_shape=jax.ShapeDtypeStruct((Bp, C), jnp.float32),
        in_specs=[vmem] * 6,
        out_specs=vmem,
    )(x_cat,
      params["w_in_fused"], params["w_hh_fused"], params["b_fused"],
      params["w_out_ext"], params["b_out"])
    return out[:B]


def make_params(key, V, D, H, C):
    ks = jax.random.split(key, 11)
    s = 0.1

    def rnd(k, shape):
        return jax.random.normal(k, shape, jnp.float32) * s

    emb = rnd(ks[0], (V, D))
    # Per-direction LSTM weights, pre-transposed for right-multiplication.
    # Gate column order inside each direction: i, f, g, o (PyTorch convention).
    w_ih_f = rnd(ks[1], (D, 4 * H))
    w_hh_f = rnd(ks[2], (H, 4 * H))
    b_f = rnd(ks[3], (1, 4 * H)) + rnd(ks[4], (1, 4 * H))       # b_ih + b_hh
    w_ih_b = rnd(ks[5], (D, 4 * H))
    w_hh_b = rnd(ks[6], (H, 4 * H))
    b_b = rnd(ks[7], (1, 4 * H)) + rnd(ks[8], (1, 4 * H))
    w_out = rnd(ks[9], (2 * H, C))
    b_out = rnd(ks[10], (1, C))

    # Round matmul weights to bf16 once, so the kernel (bf16 storage) and the
    # f32 reference share the exact same effective weights.
    q = lambda w: w.astype(jnp.bfloat16).astype(jnp.float32)
    w_ih_f, w_hh_f, w_ih_b, w_hh_b, w_out = map(
        q, (w_ih_f, w_hh_f, w_ih_b, w_hh_b, w_out))

    H2, H8 = 2 * H, 8 * H
    # Fused, direction-interleaved gate layout (columns):
    #   [ i_f i_b | f_f f_b | g_f g_b | o_f o_b ], each sub-block H lanes wide.
    # Input rows:  [x_t (fwd) ; x_{T-1-t} (bwd)]          -> W_in_fused (2D, 8H)
    # State rows:  [c (zeros, H2) ; h_fwd (H) ; h_bwd (H)] -> W_hh_fused (2H2, 8H)
    w_in = jnp.zeros((2 * D, H8), jnp.float32)
    w_hh = jnp.zeros((2 * H2, H8), jnp.float32)
    b = jnp.zeros((1, H8), jnp.float32)
    for k in range(4):                       # gate order i, f, g, o
        cf = slice(k * H2, k * H2 + H)       # fwd sub-block of gate k
        cb = slice(k * H2 + H, (k + 1) * H2) # bwd sub-block of gate k
        sk = slice(k * H, (k + 1) * H)       # gate k in per-direction layout
        w_in = w_in.at[0:D, cf].set(w_ih_f[:, sk])
        w_in = w_in.at[D:2 * D, cb].set(w_ih_b[:, sk])
        w_hh = w_hh.at[H2:H2 + H, cf].set(w_hh_f[:, sk])
        w_hh = w_hh.at[H2 + H:2 * H2, cb].set(w_hh_b[:, sk])
        b = b.at[:, cf].set(b_f[:, sk])
        b = b.at[:, cb].set(b_b[:, sk])

    # sigmoid-via-tanh: fold the x/2 prescale of the i/f/o gate columns into the
    # weights and bias (exact: scaling by 0.5 is lossless in bf16).
    col = jnp.arange(H8)
    is_g = (col >= 2 * H2) & (col < 3 * H2)
    scale = jnp.where(is_g, 1.0, 0.5)
    w_in, w_hh, b = w_in * scale, w_hh * scale, b * scale

    # Classifier weight padded with zero rows for the c half of the state.
    w_out_ext = jnp.zeros((2 * H2, C), jnp.float32).at[H2:, :].set(w_out)

    return {
        "embed": emb,
        "w_in_fused": w_in.astype(jnp.bfloat16),
        "w_hh_fused": w_hh.astype(jnp.bfloat16),
        "b_fused": b,
        "w_out_ext": w_out_ext.astype(jnp.bfloat16),
        "b_out": b_out,
        # Unfused, unscaled f32 weights for the pure-JAX reference.
        "raw": dict(w_ih_f=w_ih_f, w_hh_f=w_hh_f, b_f=b_f,
                    w_ih_b=w_ih_b, w_hh_b=w_hh_b, b_b=b_b,
                    w_out=w_out, b_out=b_out),
    }


def reference_forward(xe, raw):
    """Pure-JAX f32 reference of the PyTorch forward pass."""
    T, B, D = xe.shape
    H = raw["w_hh_f"].shape[0]

    def run(xs, w_ih, w_hh, bias):
        h = jnp.zeros((B, H), jnp.float32)
        c = jnp.zeros((B, H), jnp.float32)
        hs = []
        for t in range(T):
            g = xs[t] @ w_ih + h @ w_hh + bias
            i = jax.nn.sigmoid(g[:, 0:H])
            f = jax.nn.sigmoid(g[:, H:2 * H])
            gg = jnp.tanh(g[:, 2 * H:3 * H])
            o = jax.nn.sigmoid(g[:, 3 * H:])
            c = f * c + i * gg
            h = o * jnp.tanh(c)
            hs.append(h)
        return jnp.stack(hs)                      # (T, B, H)

    hf = run(xe, raw["w_ih_f"], raw["w_hh_f"], raw["b_f"])
    hb = run(xe[::-1], raw["w_ih_b"], raw["w_hh_b"], raw["b_b"])[::-1]
    y = jnp.concatenate([hf, hb], axis=-1)        # (T, B, 2H)
    y = jnp.tanh(y)
    y = jnp.max(y, axis=0)                        # max_pool1d over T
    y = jnp.tanh(y)
    return y @ raw["w_out"] + raw["b_out"]        # (B, C)


if __name__ == "__main__":
    # Small config: vocab V=50, embed D=16, hidden H=32, classes C=4,
    # seq_len T=8, batch B=2, num_layers=1 (bidirectional).
    V, D, H, C, T, B = 50, 16, 32, 4, 8, 2

    key = jax.random.PRNGKey(0)
    k_params, k_tokens = jax.random.split(key)
    params = make_params(k_params, V, D, H, C)

    # Token ids, seq-major (T, B) like PyTorch LSTM default layout.
    tokens = jax.random.randint(k_tokens, (T, B), 0, V, dtype=jnp.int32)

    # Embedding lookup (gather) as JAX glue; dropout layers are identity at
    # inference time.
    # TODO(synk): max_norm / scale_grad_by_freq only affect training; ignored here.
    xe = params["embed"][tokens]                  # (T, B, D)

    logits = bilstm_forward(xe, params)
    logits = jax.block_until_ready(logits)
    assert logits.shape == (B, C)

    ref = reference_forward(xe, params["raw"])
    assert jnp.allclose(logits, ref, atol=2e-2, rtol=2e-2), (logits, ref)
    print("KERNEL_OK")
</pallas_src>

<mosaic_0001>
module attributes {stable_mosaic.version = 11 : i64} {
  func.func @kernel(%arg0: memref<64x32xbf16, #tpu.memory_space<vmem>>, %arg1: memref<32x256xbf16, #tpu.memory_space<vmem>>, %arg2: memref<128x256xbf16, #tpu.memory_space<vmem>>, %arg3: memref<1x256xf32, #tpu.memory_space<vmem>>, %arg4: memref<128x4xbf16, #tpu.memory_space<vmem>>, %arg5: memref<1x4xf32, #tpu.memory_space<vmem>>, %arg6: memref<8x4xf32, #tpu.memory_space<vmem>>) attributes {dimension_semantics = [], scalar_prefetch = 0 : i64, scratch_operands = 0 : i64, tpu.core_type = #tpu.core_type<tc>} {
    %c0 = arith.constant 0 : index
    %c0_0 = arith.constant 0 : index
    %0 = vector.load %arg0[%c0, %c0_0] : memref<64x32xbf16, #tpu.memory_space<vmem>>, vector<64x32xbf16>
    %c0_1 = arith.constant 0 : index
    %c0_2 = arith.constant 0 : index
    %1 = vector.load %arg1[%c0_1, %c0_2] : memref<32x256xbf16, #tpu.memory_space<vmem>>, vector<32x256xbf16>
    %cst = arith.constant dense<0.000000e+00> : vector<64x256xf32>
    %2 = tpu.matmul %0, %1, %cst {dimension_numbers = #tpu.dot_dimension_numbers<[1], [0], [0], [1], [0, 0, 1, 1], [], []>} : vector<64x32xbf16>, vector<32x256xbf16>, vector<64x256xf32> -> vector<64x256xf32>
    %c0_3 = arith.constant 0 : index
    %c0_4 = arith.constant 0 : index
    %3 = vector.load %arg3[%c0_3, %c0_4] : memref<1x256xf32, #tpu.memory_space<vmem>>, vector<1x256xf32>
    %4 = vector.broadcast %3 : vector<1x256xf32> to vector<64x256xf32>
    %5 = arith.addf %2, %4 : vector<64x256xf32>
    %c0_5 = arith.constant 0 : index
    %c0_6 = arith.constant 0 : index
    %6 = vector.load %arg2[%c0_5, %c0_6] : memref<128x256xbf16, #tpu.memory_space<vmem>>, vector<128x256xbf16>
    %7 = tpu.iota {dimensions = array<i32: 1>} : vector<8x256xi32>
    %c128_i32 = arith.constant 128 : i32
    %8 = vector.broadcast %c128_i32 : i32 to vector<8x256xi32>
    %9 = arith.cmpi sge, %7, %8 : vector<8x256xi32>
    %c192_i32 = arith.constant 192 : i32
    %10 = vector.broadcast %c192_i32 : i32 to vector<8x256xi32>
    %11 = arith.cmpi slt, %7, %10 : vector<8x256xi32>
    %12 = arith.andi %9, %11 : vector<8x256xi1>
    %13 = tpu.iota {dimensions = array<i32: 1>} : vector<8x128xi32>
    %c64_i32 = arith.constant 64 : i32
    %14 = vector.broadcast %c64_i32 : i32 to vector<8x128xi32>
    %15 = arith.cmpi slt, %13, %14 : vector<8x128xi32>
    %cst_7 = arith.constant 0.000000e+00 : f32
    %16 = vector.broadcast %cst_7 : f32 to vector<8x128xf32>
    %cst_8 = arith.constant 0xFF800000 : f32
    %17 = vector.broadcast %cst_8 : f32 to vector<8x128xf32>
    %18 = vector.extract_strided_slice %5 {offsets = [0, 0], sizes = [8, 256], strides = [1, 1]} : vector<64x256xf32> to vector<8x256xf32>
    %19 = arith.truncf %16 : vector<8x128xf32> to vector<8x128xbf16>
    %cst_9 = arith.constant dense<0.000000e+00> : vector<8x256xf32>
    %20 = tpu.matmul %19, %6, %cst_9 {dimension_numbers = #tpu.dot_dimension_numbers<[1], [0], [0], [1], [0, 0, 1, 1], [], []>} : vector<8x128xbf16>, vector<128x256xbf16>, vector<8x256xf32> -> vector<8x256xf32>
    %21 = arith.addf %18, %20 : vector<8x256xf32>
    %22 = math.tanh %21 : vector<8x256xf32>
    %cst_10 = arith.constant 5.000000e-01 : f32
    %23 = vector.broadcast %cst_10 : f32 to vector<8x256xf32>
    %24 = arith.mulf %23, %22 : vector<8x256xf32>
    %cst_11 = arith.constant 5.000000e-01 : f32
    %25 = vector.broadcast %cst_11 : f32 to vector<8x256xf32>
    %26 = arith.addf %24, %25 : vector<8x256xf32>
    %27 = arith.select %12, %22, %26 : vector<8x256xi1>, vector<8x256xf32>
    %28 = vector.extract_strided_slice %27 {offsets = [0, 0], sizes = [8, 128], strides = [1, 1]} : vector<8x256xf32> to vector<8x128xf32>
    %29 = vector.extract_strided_slice %27 {offsets = [0, 128], sizes = [8, 128], strides = [1, 1]} : vector<8x256xf32> to vector<8x128xf32>
    %c64_i32_12 = arith.constant 64 : i32
    %30 = tpu.dynamic_rotate %28 by %c64_i32_12 dim 1 : vector<8x128xf32>, i32 -> vector<8x128xf32>
    %31 = arith.mulf %28, %29 : vector<8x128xf32>
    %32 = arith.mulf %30, %16 : vector<8x128xf32>
    %33 = arith.addf %31, %32 : vector<8x128xf32>
    %34 = math.tanh %33 : vector<8x128xf32>
    %c64_i32_13 = arith.constant 64 : i32
    %35 = tpu.dynamic_rotate %34 by %c64_i32_13 dim 1 : vector<8x128xf32>, i32 -> vector<8x128xf32>
    %36 = arith.mulf %29, %35 : vector<8x128xf32>
    %37 = arith.select %15, %33, %36 : vector<8x128xi1>, vector<8x128xf32>
    %38 = arith.maximumf %17, %37 : vector<8x128xf32>
    %39 = vector.extract_strided_slice %5 {offsets = [8, 0], sizes = [8, 256], strides = [1, 1]} : vector<64x256xf32> to vector<8x256xf32>
    %40 = arith.truncf %37 : vector<8x128xf32> to vector<8x128xbf16>
    %cst_14 = arith.constant dense<0.000000e+00> : vector<8x256xf32>
    %41 = tpu.matmul %40, %6, %cst_14 {dimension_numbers = #tpu.dot_dimension_numbers<[1], [0], [0], [1], [0, 0, 1, 1], [], []>} : vector<8x128xbf16>, vector<128x256xbf16>, vector<8x256xf32> -> vector<8x256xf32>
    %42 = arith.addf %39, %41 : vector<8x256xf32>
    %43 = math.tanh %42 : vector<8x256xf32>
    %cst_15 = arith.constant 5.000000e-01 : f32
    %44 = vector.broadcast %cst_15 : f32 to vector<8x256xf32>
    %45 = arith.mulf %44, %43 : vector<8x256xf32>
    %cst_16 = arith.constant 5.000000e-01 : f32
    %46 = vector.broadcast %cst_16 : f32 to vector<8x256xf32>
    %47 = arith.addf %45, %46 : vector<8x256xf32>
    %48 = arith.select %12, %43, %47 : vector<8x256xi1>, vector<8x256xf32>
    %49 = vector.extract_strided_slice %48 {offsets = [0, 0], sizes = [8, 128], strides = [1, 1]} : vector<8x256xf32> to vector<8x128xf32>
    %50 = vector.extract_strided_slice %48 {offsets = [0, 128], sizes = [8, 128], strides = [1, 1]} : vector<8x256xf32> to vector<8x128xf32>
    %c64_i32_17 = arith.constant 64 : i32
    %51 = tpu.dynamic_rotate %49 by %c64_i32_17 dim 1 : vector<8x128xf32>, i32 -> vector<8x128xf32>
    %52 = arith.mulf %49, %50 : vector<8x128xf32>
    %53 = arith.mulf %51, %37 : vector<8x128xf32>
    %54 = arith.addf %52, %53 : vector<8x128xf32>
    %55 = math.tanh %54 : vector<8x128xf32>
    %c64_i32_18 = arith.constant 64 : i32
    %56 = tpu.dynamic_rotate %55 by %c64_i32_18 dim 1 : vector<8x128xf32>, i32 -> vector<8x128xf32>
    %57 = arith.mulf %50, %56 : vector<8x128xf32>
    %58 = arith.select %15, %54, %57 : vector<8x128xi1>, vector<8x128xf32>
    %59 = arith.maximumf %38, %58 : vector<8x128xf32>
    %60 = vector.extract_strided_slice %5 {offsets = [16, 0], sizes = [8, 256], strides = [1, 1]} : vector<64x256xf32> to vector<8x256xf32>
    %61 = arith.truncf %58 : vector<8x128xf32> to vector<8x128xbf16>
    %cst_19 = arith.constant dense<0.000000e+00> : vector<8x256xf32>
    %62 = tpu.matmul %61, %6, %cst_19 {dimension_numbers = #tpu.dot_dimension_numbers<[1], [0], [0], [1], [0, 0, 1, 1], [], []>} : vector<8x128xbf16>, vector<128x256xbf16>, vector<8x256xf32> -> vector<8x256xf32>
    %63 = arith.addf %60, %62 : vector<8x256xf32>
    %64 = math.tanh %63 : vector<8x256xf32>
    %cst_20 = arith.constant 5.000000e-01 : f32
    %65 = vector.broadcast %cst_20 : f32 to vector<8x256xf32>
    %66 = arith.mulf %65, %64 : vector<8x256xf32>
    %cst_21 = arith.constant 5.000000e-01 : f32
    %67 = vector.broadcast %cst_21 : f32 to vector<8x256xf32>
    %68 = arith.addf %66, %67 : vector<8x256xf32>
    %69 = arith.select %12, %64, %68 : vector<8x256xi1>, vector<8x256xf32>
    %70 = vector.extract_strided_slice %69 {offsets = [0, 0], sizes = [8, 128], strides = [1, 1]} : vector<8x256xf32> to vector<8x128xf32>
    %71 = vector.extract_strided_slice %69 {offsets = [0, 128], sizes = [8, 128], strides = [1, 1]} : vector<8x256xf32> to vector<8x128xf32>
    %c64_i32_22 = arith.constant 64 : i32
    %72 = tpu.dynamic_rotate %70 by %c64_i32_22 dim 1 : vector<8x128xf32>, i32 -> vector<8x128xf32>
    %73 = arith.mulf %70, %71 : vector<8x128xf32>
    %74 = arith.mulf %72, %58 : vector<8x128xf32>
    %75 = arith.addf %73, %74 : vector<8x128xf32>
    %76 = math.tanh %75 : vector<8x128xf32>
    %c64_i32_23 = arith.constant 64 : i32
    %77 = tpu.dynamic_rotate %76 by %c64_i32_23 dim 1 : vector<8x128xf32>, i32 -> vector<8x128xf32>
    %78 = arith.mulf %71, %77 : vector<8x128xf32>
    %79 = arith.select %15, %75, %78 : vector<8x128xi1>, vector<8x128xf32>
    %80 = arith.maximumf %59, %79 : vector<8x128xf32>
    %81 = vector.extract_strided_slice %5 {offsets = [24, 0], sizes = [8, 256], strides = [1, 1]} : vector<64x256xf32> to vector<8x256xf32>
    %82 = arith.truncf %79 : vector<8x128xf32> to vector<8x128xbf16>
    %cst_24 = arith.constant dense<0.000000e+00> : vector<8x256xf32>
    %83 = tpu.matmul %82, %6, %cst_24 {dimension_numbers = #tpu.dot_dimension_numbers<[1], [0], [0], [1], [0, 0, 1, 1], [], []>} : vector<8x128xbf16>, vector<128x256xbf16>, vector<8x256xf32> -> vector<8x256xf32>
    %84 = arith.addf %81, %83 : vector<8x256xf32>
    %85 = math.tanh %84 : vector<8x256xf32>
    %cst_25 = arith.constant 5.000000e-01 : f32
    %86 = vector.broadcast %cst_25 : f32 to vector<8x256xf32>
    %87 = arith.mulf %86, %85 : vector<8x256xf32>
    %cst_26 = arith.constant 5.000000e-01 : f32
    %88 = vector.broadcast %cst_26 : f32 to vector<8x256xf32>
    %89 = arith.addf %87, %88 : vector<8x256xf32>
    %90 = arith.select %12, %85, %89 : vector<8x256xi1>, vector<8x256xf32>
    %91 = vector.extract_strided_slice %90 {offsets = [0, 0], sizes = [8, 128], strides = [1, 1]} : vector<8x256xf32> to vector<8x128xf32>
    %92 = vector.extract_strided_slice %90 {offsets = [0, 128], sizes = [8, 128], strides = [1, 1]} : vector<8x256xf32> to vector<8x128xf32>
    %c64_i32_27 = arith.constant 64 : i32
    %93 = tpu.dynamic_rotate %91 by %c64_i32_27 dim 1 : vector<8x128xf32>, i32 -> vector<8x128xf32>
    %94 = arith.mulf %91, %92 : vector<8x128xf32>
    %95 = arith.mulf %93, %79 : vector<8x128xf32>
    %96 = arith.addf %94, %95 : vector<8x128xf32>
    %97 = math.tanh %96 : vector<8x128xf32>
    %c64_i32_28 = arith.constant 64 : i32
    %98 = tpu.dynamic_rotate %97 by %c64_i32_28 dim 1 : vector<8x128xf32>, i32 -> vector<8x128xf32>
    %99 = arith.mulf %92, %98 : vector<8x128xf32>
    %100 = arith.select %15, %96, %99 : vector<8x128xi1>, vector<8x128xf32>
    %101 = arith.maximumf %80, %100 : vector<8x128xf32>
    %102 = vector.extract_strided_slice %5 {offsets = [32, 0], sizes = [8, 256], strides = [1, 1]} : vector<64x256xf32> to vector<8x256xf32>
    %103 = arith.truncf %100 : vector<8x128xf32> to vector<8x128xbf16>
    %cst_29 = arith.constant dense<0.000000e+00> : vector<8x256xf32>
    %104 = tpu.matmul %103, %6, %cst_29 {dimension_numbers = #tpu.dot_dimension_numbers<[1], [0], [0], [1], [0, 0, 1, 1], [], []>} : vector<8x128xbf16>, vector<128x256xbf16>, vector<8x256xf32> -> vector<8x256xf32>
    %105 = arith.addf %102, %104 : vector<8x256xf32>
    %106 = math.tanh %105 : vector<8x256xf32>
    %cst_30 = arith.constant 5.000000e-01 : f32
    %107 = vector.broadcast %cst_30 : f32 to vector<8x256xf32>
    %108 = arith.mulf %107, %106 : vector<8x256xf32>
    %cst_31 = arith.constant 5.000000e-01 : f32
    %109 = vector.broadcast %cst_31 : f32 to vector<8x256xf32>
    %110 = arith.addf %108, %109 : vector<8x256xf32>
    %111 = arith.select %12, %106, %110 : vector<8x256xi1>, vector<8x256xf32>
    %112 = vector.extract_strided_slice %111 {offsets = [0, 0], sizes = [8, 128], strides = [1, 1]} : vector<8x256xf32> to vector<8x128xf32>
    %113 = vector.extract_strided_slice %111 {offsets = [0, 128], sizes = [8, 128], strides = [1, 1]} : vector<8x256xf32> to vector<8x128xf32>
    %c64_i32_32 = arith.constant 64 : i32
    %114 = tpu.dynamic_rotate %112 by %c64_i32_32 dim 1 : vector<8x128xf32>, i32 -> vector<8x128xf32>
    %115 = arith.mulf %112, %113 : vector<8x128xf32>
    %116 = arith.mulf %114, %100 : vector<8x128xf32>
    %117 = arith.addf %115, %116 : vector<8x128xf32>
    %118 = math.tanh %117 : vector<8x128xf32>
    %c64_i32_33 = arith.constant 64 : i32
    %119 = tpu.dynamic_rotate %118 by %c64_i32_33 dim 1 : vector<8x128xf32>, i32 -> vector<8x128xf32>
    %120 = arith.mulf %113, %119 : vector<8x128xf32>
    %121 = arith.select %15, %117, %120 : vector<8x128xi1>, vector<8x128xf32>
    %122 = arith.maximumf %101, %121 : vector<8x128xf32>
    %123 = vector.extract_strided_slice %5 {offsets = [40, 0], sizes = [8, 256], strides = [1, 1]} : vector<64x256xf32> to vector<8x256xf32>
    %124 = arith.truncf %121 : vector<8x128xf32> to vector<8x128xbf16>
    %cst_34 = arith.constant dense<0.000000e+00> : vector<8x256xf32>
    %125 = tpu.matmul %124, %6, %cst_34 {dimension_numbers = #tpu.dot_dimension_numbers<[1], [0], [0], [1], [0, 0, 1, 1], [], []>} : vector<8x128xbf16>, vector<128x256xbf16>, vector<8x256xf32> -> vector<8x256xf32>
    %126 = arith.addf %123, %125 : vector<8x256xf32>
    %127 = math.tanh %126 : vector<8x256xf32>
    %cst_35 = arith.constant 5.000000e-01 : f32
    %128 = vector.broadcast %cst_35 : f32 to vector<8x256xf32>
    %129 = arith.mulf %128, %127 : vector<8x256xf32>
    %cst_36 = arith.constant 5.000000e-01 : f32
    %130 = vector.broadcast %cst_36 : f32 to vector<8x256xf32>
    %131 = arith.addf %129, %130 : vector<8x256xf32>
    %132 = arith.select %12, %127, %131 : vector<8x256xi1>, vector<8x256xf32>
    %133 = vector.extract_strided_slice %132 {offsets = [0, 0], sizes = [8, 128], strides = [1, 1]} : vector<8x256xf32> to vector<8x128xf32>
    %134 = vector.extract_strided_slice %132 {offsets = [0, 128], sizes = [8, 128], strides = [1, 1]} : vector<8x256xf32> to vector<8x128xf32>
    %c64_i32_37 = arith.constant 64 : i32
    %135 = tpu.dynamic_rotate %133 by %c64_i32_37 dim 1 : vector<8x128xf32>, i32 -> vector<8x128xf32>
    %136 = arith.mulf %133, %134 : vector<8x128xf32>
    %137 = arith.mulf %135, %121 : vector<8x128xf32>
    %138 = arith.addf %136, %137 : vector<8x128xf32>
    %139 = math.tanh %138 : vector<8x128xf32>
    %c64_i32_38 = arith.constant 64 : i32
    %140 = tpu.dynamic_rotate %139 by %c64_i32_38 dim 1 : vector<8x128xf32>, i32 -> vector<8x128xf32>
    %141 = arith.mulf %134, %140 : vector<8x128xf32>
    %142 = arith.select %15, %138, %141 : vector<8x128xi1>, vector<8x128xf32>
    %143 = arith.maximumf %122, %142 : vector<8x128xf32>
    %144 = vector.extract_strided_slice %5 {offsets = [48, 0], sizes = [8, 256], strides = [1, 1]} : vector<64x256xf32> to vector<8x256xf32>
    %145 = arith.truncf %142 : vector<8x128xf32> to vector<8x128xbf16>
    %cst_39 = arith.constant dense<0.000000e+00> : vector<8x256xf32>
    %146 = tpu.matmul %145, %6, %cst_39 {dimension_numbers = #tpu.dot_dimension_numbers<[1], [0], [0], [1], [0, 0, 1, 1], [], []>} : vector<8x128xbf16>, vector<128x256xbf16>, vector<8x256xf32> -> vector<8x256xf32>
    %147 = arith.addf %144, %146 : vector<8x256xf32>
    %148 = math.tanh %147 : vector<8x256xf32>
    %cst_40 = arith.constant 5.000000e-01 : f32
    %149 = vector.broadcast %cst_40 : f32 to vector<8x256xf32>
    %150 = arith.mulf %149, %148 : vector<8x256xf32>
    %cst_41 = arith.constant 5.000000e-01 : f32
    %151 = vector.broadcast %cst_41 : f32 to vector<8x256xf32>
    %152 = arith.addf %150, %151 : vector<8x256xf32>
    %153 = arith.select %12, %148, %152 : vector<8x256xi1>, vector<8x256xf32>
    %154 = vector.extract_strided_slice %153 {offsets = [0, 0], sizes = [8, 128], strides = [1, 1]} : vector<8x256xf32> to vector<8x128xf32>
    %155 = vector.extract_strided_slice %153 {offsets = [0, 128], sizes = [8, 128], strides = [1, 1]} : vector<8x256xf32> to vector<8x128xf32>
    %c64_i32_42 = arith.constant 64 : i32
    %156 = tpu.dynamic_rotate %154 by %c64_i32_42 dim 1 : vector<8x128xf32>, i32 -> vector<8x128xf32>
    %157 = arith.mulf %154, %155 : vector<8x128xf32>
    %158 = arith.mulf %156, %142 : vector<8x128xf32>
    %159 = arith.addf %157, %158 : vector<8x128xf32>
    %160 = math.tanh %159 : vector<8x128xf32>
    %c64_i32_43 = arith.constant 64 : i32
    %161 = tpu.dynamic_rotate %160 by %c64_i32_43 dim 1 : vector<8x128xf32>, i32 -> vector<8x128xf32>
    %162 = arith.mulf %155, %161 : vector<8x128xf32>
    %163 = arith.select %15, %159, %162 : vector<8x128xi1>, vector<8x128xf32>
    %164 = arith.maximumf %143, %163 : vector<8x128xf32>
    %165 = vector.extract_strided_slice %5 {offsets = [56, 0], sizes = [8, 256], strides = [1, 1]} : vector<64x256xf32> to vector<8x256xf32>
    %166 = arith.truncf %163 : vector<8x128xf32> to vector<8x128xbf16>
    %cst_44 = arith.constant dense<0.000000e+00> : vector<8x256xf32>
    %167 = tpu.matmul %166, %6, %cst_44 {dimension_numbers = #tpu.dot_dimension_numbers<[1], [0], [0], [1], [0, 0, 1, 1], [], []>} : vector<8x128xbf16>, vector<128x256xbf16>, vector<8x256xf32> -> vector<8x256xf32>
    %168 = arith.addf %165, %167 : vector<8x256xf32>
    %169 = math.tanh %168 : vector<8x256xf32>
    %cst_45 = arith.constant 5.000000e-01 : f32
    %170 = vector.broadcast %cst_45 : f32 to vector<8x256xf32>
    %171 = arith.mulf %170, %169 : vector<8x256xf32>
    %cst_46 = arith.constant 5.000000e-01 : f32
    %172 = vector.broadcast %cst_46 : f32 to vector<8x256xf32>
    %173 = arith.addf %171, %172 : vector<8x256xf32>
    %174 = arith.select %12, %169, %173 : vector<8x256xi1>, vector<8x256xf32>
    %175 = vector.extract_strided_slice %174 {offsets = [0, 0], sizes = [8, 128], strides = [1, 1]} : vector<8x256xf32> to vector<8x128xf32>
    %176 = vector.extract_strided_slice %174 {offsets = [0, 128], sizes = [8, 128], strides = [1, 1]} : vector<8x256xf32> to vector<8x128xf32>
    %c64_i32_47 = arith.constant 64 : i32
    %177 = tpu.dynamic_rotate %175 by %c64_i32_47 dim 1 : vector<8x128xf32>, i32 -> vector<8x128xf32>
    %178 = arith.mulf %175, %176 : vector<8x128xf32>
    %179 = arith.mulf %177, %163 : vector<8x128xf32>
    %180 = arith.addf %178, %179 : vector<8x128xf32>
    %181 = math.tanh %180 : vector<8x128xf32>
    %c64_i32_48 = arith.constant 64 : i32
    %182 = tpu.dynamic_rotate %181 by %c64_i32_48 dim 1 : vector<8x128xf32>, i32 -> vector<8x128xf32>
    %183 = arith.mulf %176, %182 : vector<8x128xf32>
    %184 = arith.select %15, %180, %183 : vector<8x128xi1>, vector<8x128xf32>
    %185 = arith.maximumf %164, %184 : vector<8x128xf32>
    %186 = math.tanh %185 : vector<8x128xf32>
    %187 = math.tanh %186 : vector<8x128xf32>
    %188 = arith.truncf %187 : vector<8x128xf32> to vector<8x128xbf16>
    %c0_49 = arith.constant 0 : index
    %c0_50 = arith.constant 0 : index
    %189 = vector.load %arg4[%c0_49, %c0_50] : memref<128x4xbf16, #tpu.memory_space<vmem>>, vector<128x4xbf16>
    %cst_51 = arith.constant dense<0.000000e+00> : vector<8x4xf32>
    %190 = tpu.matmul %188, %189, %cst_51 {dimension_numbers = #tpu.dot_dimension_numbers<[1], [0], [0], [1], [0, 0, 1, 1], [], []>} : vector<8x128xbf16>, vector<128x4xbf16>, vector<8x4xf32> -> vector<8x4xf32>
    %c0_52 = arith.constant 0 : index
    %c0_53 = arith.constant 0 : index
    %191 = vector.load %arg5[%c0_52, %c0_53] : memref<1x4xf32, #tpu.memory_space<vmem>>, vector<1x4xf32>
    %192 = vector.broadcast %191 : vector<1x4xf32> to vector<8x4xf32>
    %193 = arith.addf %190, %192 : vector<8x4xf32>
    %c0_54 = arith.constant 0 : index
    %c0_55 = arith.constant 0 : index
    %194 = vector.load %arg6[%c0_54, %c0_55] : memref<8x4xf32, #tpu.memory_space<vmem>>, vector<8x4xf32>
    tpu.vector_store %arg6[%c0_54, %c0_55], %193 {strides = array<i32>} : memref<8x4xf32, #tpu.memory_space<vmem>>, vector<8x4xf32>,
    return
  }
}

</mosaic_0001>

<llo_original>
// kernel: tpu_custom_call.1
$region0: #{tpu_custom_call.1}
  #allocation0 [shape = 'u32[]', space=smem, size = 0x4, offset = 0x4, fixed_abs, tag = 'smem constant byte address 0x4 - core index']
  #allocation1 [shape = 'u32[144,128]{1,0:T(1,128)}', space=vmem, size = 0x12000, scoped, tag = 'internal scratch']
  %s0 = inlined_call_operand.vmem [shape: bf16[64,32], index: 0, kind: input, shape index: {}]
  %s1 = inlined_call_operand.vmem [shape: bf16[32,256], index: 1, kind: input, shape index: {}]
  %s2 = inlined_call_operand.hbm [shape: bf16[128,256], index: 2, kind: input, shape index: {}]
  %s3 = inlined_call_operand.vmem [shape: f32[1,256], index: 3, kind: input, shape index: {}]
  %s4 = inlined_call_operand.vmem [shape: bf16[128,4], index: 4, kind: input, shape index: {}]
  %s5 = inlined_call_operand.vmem [shape: f32[1,4], index: 5, kind: input, shape index: {}]
  %s6 = inlined_call_operand.vmem [shape: f32[8,4], index: 6, kind: output, shape index: {}]
  %s7 = sld [smem:[#allocation0]]
  $region38: #{tpu_custom_call.1} parent=0
    _
  %s9 = ssub.s32 1, %s7
  %s10 = scalar_select 0, %s9, %s7
  $region1: #{tpu_custom_call.1} parent=0
    #allocation2 [shape = 'u8[65536]{0}', space=vmem, size = 0x10000, scoped, tag = 'input window, operand 2, single buffered']
    #allocation3 [shape = 's32[1]{0}', space=sflag, size = 0x4, scoped, tag = 'scoped memory for tpu_custom_call.1']
    %11 = vsyncpa [#allocation3], 0
    // Predicated region
    $region2: #{tpu_custom_call.1} parent=1 // pred_check
      _
    $region3: #{tpu_custom_call.1} parent=1 // pred_check_branch
      %13 = sbr.rel (0) target = $region5
    $region4: #{tpu_custom_call.1} parent=1 // pred_region
      _
    $region5: #{tpu_custom_call.1} parent=1 // pred_fallthru
      _
    // Predicated region
    $region6: #{tpu_custom_call.1} parent=1 // pred_check
      _
    $region7: #{tpu_custom_call.1} parent=1 // pred_check_branch
      %15 = sbr.rel (0) target = $region9
    $region8: #{tpu_custom_call.1} parent=1 // pred_region
      _
    $region9: #{tpu_custom_call.1} parent=1 // pred_fallthru
      _
    // Predicated region
    $region10: #{tpu_custom_call.1} parent=1 // pred_check
      _
    $region11: #{tpu_custom_call.1} parent=1 // pred_check_branch
      %17 = sbr.rel (0) target = $region13
    $region12: #{tpu_custom_call.1} parent=1 // pred_region
      %s19 = ssub.s32 2048, 2048
      %20 = vsyncadd [#allocation3], %s19
      %s21 = sshll.u32 [#allocation2], 4
      %s22 = int_to_ptr.vmem [resolvable:$true] %s21
      %27 = dma.hbm_to_vmem [thread:$0]  %s2, 2048, %s22, [#allocation3], 128, 128, 8
    $region13: #{tpu_custom_call.1} parent=1 // pred_fallthru
      _
    // Predicated region
    $region14: #{tpu_custom_call.1} parent=1 // pred_check
      _
    $region15: #{tpu_custom_call.1} parent=1 // pred_check_branch
      %29 = sbr.rel (0) target = $region17
    $region16: #{tpu_custom_call.1} parent=1 // pred_region
      _
    $region17: #{tpu_custom_call.1} parent=1 // pred_fallthru
      _
    // Predicated region
    $region18: #{tpu_custom_call.1} parent=1 // pred_check
      _
    $region19: #{tpu_custom_call.1} parent=1 // pred_check_branch
      %31 = sbr.rel (0) target = $region21
    $region20: #{tpu_custom_call.1} parent=1 // pred_region
      _
    $region21: #{tpu_custom_call.1} parent=1 // pred_fallthru
      _
    // Predicated region
    $region22: #{tpu_custom_call.1} parent=1 // pred_check
      _
    $region23: #{tpu_custom_call.1} parent=1 // pred_check_branch
      %33 = sbr.rel (0) target = $region25
    $region24: #{tpu_custom_call.1} parent=1 // pred_region
      _
    $region25: #{tpu_custom_call.1} parent=1 // pred_fallthru
      _
    // Predicated region
    $region26: #{tpu_custom_call.1} parent=1 // pred_check
      _
    $region27: #{tpu_custom_call.1} parent=1 // pred_check_branch
      %35 = sbr.rel (0) target = $region29
    $region28: #{tpu_custom_call.1} parent=1 // pred_region
      %36 = dma.done [#allocation3], 2048
    $region29: #{tpu_custom_call.1} parent=1 // pred_fallthru
      _
    %v38 = vld [vmem:[%s0] sm:$0xf]
    %v39 = vld [vmem:[%s0 + $0x4] sm:$0xf]
    %v40 = vld [vmem:[%s0 + $0x8] sm:$0xf]
    %v41 = vld [vmem:[%s0 + $0xc] sm:$0xf]
    %v42 = vld [vmem:[%s0 + $0x10] sm:$0xf]
    %v43 = vld [vmem:[%s0 + $0x14] sm:$0xf]
    %v44 = vld [vmem:[%s0 + $0x18] sm:$0xf]
    %v45 = vld [vmem:[%s0 + $0x1c] sm:$0xf]
    %v46 = vld [vmem:[%s1] sm:$0xff]
    %v47 = vld [vmem:[%s1 + $0x8] sm:$0xff]
    %v48 = vld [vmem:[%s1 + $0x10] sm:$0xff]
    %v49 = vld [vmem:[%s1 + $0x18] sm:$0xff]
    %v50 = vld [vmem:[%s3] sm:$0x3]
    %v52 = vlaneseq
    %v53 = vshrl.u32 %v52, 7
    %v54 = vsub.s32 0, %v53
    %v55 = vrot.slane %v50, %v54
    %v56 = vlaneseq
    %v57 = vshrl.u32 %v56, 7
    %v58 = vsub.s32 1, %v57
    %v59 = vrot.slane %v50, %v58
    %v70 = vunpack.c.l.b16 %v38
    %v71 = vunpack.c.l.b16 %v39
    %v72 = vunpack.c.l.b16 %v40
    %v73 = vunpack.c.l.b16 %v41
    %v74 = vunpack.c.l.b16 %v42
    %v75 = vunpack.c.l.b16 %v43
    %v76 = vunpack.c.l.b16 %v44
    %v77 = vunpack.c.l.b16 %v45
    %v78 = vpack.c.b16 %v71, %v70
    %v79 = vpack.c.b16 %v73, %v72
    %v80 = vpack.c.b16 %v75, %v74
    %v81 = vpack.c.b16 %v77, %v76
    %v86 = vunpack.c.l.b16 %v46
    %v87 = vunpack.c.h.b16 %v46
    %v88 = vunpack.c.l.b16 %v47
    %v89 = vunpack.c.h.b16 %v47
    %v90 = vunpack.c.l.b16 %v48
    %v91 = vunpack.c.h.b16 %v48
    %v92 = vunpack.c.l.b16 %v49
    %v93 = vunpack.c.h.b16 %v49
    %v94 = vpack.c.b16 %v88, %v86
    %v95 = vpack.c.b16 %v89, %v87
    %v96 = vpack.c.b16 %v92, %v90
    %v97 = vpack.c.b16 %v93, %v91
    %vm102 = vcmask 261120
    %v104 = vsel %vm102, %v78, 0
    %v107 = vsel %vm102, %v79, 0
    %v110 = vsel %vm102, %v80, 0
    %v113 = vsel %vm102, %v81, 0
    %115 = vmatprep.subr.bf16.mxu0 %v95
    %116 = vmatpush1.bf16.msra.mxu0 %v94
    %117 = vmatprep.subr.bf16.mxu0 %v97
    %118 = vmatpush1.bf16.msra.mxu0 %v96
    %119 = vmatprep.subr.bf16.mxu0 0
    %120 = vmatpush1.bf16.msra.mxu0 0
    %121 = vmatprep.subr.bf16.mxu0 0
    %122 = vmatpush1.bf16.msra.mxu0 0
    %123 = vmatprep.subr.bf16.mxu0 0
    %124 = vmatpush1.bf16.msra.mxu0 0
    %125 = vmatprep.subr.bf16.mxu0 0
    %126 = vmatpush1.bf16.msra.mxu0 0
    %127 = vmatprep.subr.bf16.mxu0 0
    %128 = vmatpush1.bf16.msra.mxu0 0
    %129 = vmatprep.subr.bf16.mxu0 0
    %130 = vmatpush1.bf16.msra.mxu0 0
    %131 = vmatprep.subr.bf16.mxu0 0
    %132 = vmatpush1.bf16.msra.mxu0 0
    %133 = vmatprep.subr.bf16.mxu0 0
    %134 = vmatpush1.bf16.msra.mxu0 0
    %135 = vmatprep.subr.bf16.mxu0 0
    %136 = vmatpush1.bf16.msra.mxu0 0
    %137 = vmatprep.subr.bf16.mxu0 0
    %138 = vmatpush1.bf16.msra.mxu0 0
    %139 = vmatprep.subr.bf16.mxu0 0
    %140 = vmatpush1.bf16.msra.mxu0 0
    %141 = vmatprep.subr.bf16.mxu0 0
    %142 = vmatpush1.bf16.msra.mxu0 0
    %143 = vmatprep.subr.bf16.mxu0 0
    %144 = vmatpush1.bf16.msra.mxu0 0
    %145 = vmatprep.subr.bf16.mxu0 0
    %146 = vmatpush1.bf16.msra.mxu0 0
    %147 = vmatprep.mubr.bf16.mxu0 0
    %148 = vmatmul.mubr.bf16.gmra.mrb[0].mxu0 %v104
    %v149 = vpop.f32.mrb[0].mxu0
    %v150 = vadd.f32 %v55, %v149
    %v151 = vpop.f32.mrb[0].mxu0
    %v152 = vadd.f32 %v59, %v151
    %v153 = vpop.f32.mrb[0].mxu0
    %v154 = vadd.f32 %v55, %v153
    %v155 = vpop.f32.mrb[0].mxu0
    %v156 = vadd.f32 %v59, %v155
    %157 = vmatprep.mubr.bf16.mxu0 0
    %158 = vmatmul.mubr.bf16.gmra.mrb[0].mxu0 %v107
    %v159 = vpop.f32.mrb[0].mxu0
    %v160 = vadd.f32 %v55, %v159
    %v161 = vpop.f32.mrb[0].mxu0
    %v162 = vadd.f32 %v59, %v161
    %v163 = vpop.f32.mrb[0].mxu0
    %v164 = vadd.f32 %v55, %v163
    %v165 = vpop.f32.mrb[0].mxu0
    %v166 = vadd.f32 %v59, %v165
    %167 = vmatprep.mubr.bf16.mxu0 0
    %168 = vmatmul.mubr.bf16.gmra.mrb[0].mxu0 %v110
    %v169 = vpop.f32.mrb[0].mxu0
    %v170 = vadd.f32 %v55, %v169
    %v171 = vpop.f32.mrb[0].mxu0
    %v172 = vadd.f32 %v59, %v171
    %v173 = vpop.f32.mrb[0].mxu0
    %v174 = vadd.f32 %v55, %v173
    %v175 = vpop.f32.mrb[0].mxu0
    %v176 = vadd.f32 %v59, %v175
    %177 = vmatprep.mubr.bf16.mxu0 0
    %178 = vmatmul.mubr.bf16.gmra.mrb[0].mxu0 %v113
    %v179 = vpop.f32.mrb[0].mxu0
    %v180 = vadd.f32 %v55, %v179
    %v181 = vpop.f32.mrb[0].mxu0
    %v182 = vadd.f32 %v59, %v181
    %v183 = vpop.f32.mrb[0].mxu0
    %v184 = vadd.f32 %v55, %v183
    %v185 = vpop.f32.mrb[0].mxu0
    %v186 = vadd.f32 %v59, %v185
    %187 = vdwg.mxu0
    %v188 = vld [vmem:[#allocation2] sm:$0xff]
    %v189 = vld [vmem:[#allocation2 + $0x8] sm:$0xff]
    %v190 = vld [vmem:[#allocation2 + $0x10] sm:$0xff]
    %v191 = vld [vmem:[#allocation2 + $0x18] sm:$0xff]
    %v192 = vld [vmem:[#allocation2 + $0x20] sm:$0xff]
    %v193 = vld [vmem:[#allocation2 + $0x28] sm:$0xff]
    %v194 = vld [vmem:[#allocation2 + $0x30] sm:$0xff]
    %v195 = vld [vmem:[#allocation2 + $0x38] sm:$0xff]
    %v196 = vld [vmem:[#allocation2 + $0x40] sm:$0xff]
    %v197 = vld [vmem:[#allocation2 + $0x48] sm:$0xff]
    %v198 = vld [vmem:[#allocation2 + $0x50] sm:$0xff]
    %v199 = vld [vmem:[#allocation2 + $0x58] sm:$0xff]
    %v200 = vld [vmem:[#allocation2 + $0x60] sm:$0xff]
    %v201 = vld [vmem:[#allocation2 + $0x68] sm:$0xff]
    %v202 = vld [vmem:[#allocation2 + $0x70] sm:$0xff]
    %v203 = vld [vmem:[#allocation2 + $0x78] sm:$0xff]
    %v204 = vlaneseq
    %v205 = vand.u32 %v204, 127
    %v206 = vadd.s32 %v205, 128
    %vm207 = vcmp.ge.s32.totalorder %v205, 128
    %vm208 = vcmp.ge.s32.totalorder %v206, 128
    %vm209 = vcmp.lt.s32.totalorder %v205, 192
    %vm210 = vcmp.lt.s32.totalorder %v206, 192
    %vm211 = vmand %vm207, %vm209
    %vm212 = vmand %vm208, %vm210
    %vm213 = vcmp.lt.s32.totalorder %v205, 64
    %v230 = vunpack.c.l.b16 %v188
    %v231 = vunpack.c.h.b16 %v188
    %v232 = vunpack.c.l.b16 %v189
    %v233 = vunpack.c.h.b16 %v189
    %v234 = vunpack.c.l.b16 %v190
    %v235 = vunpack.c.h.b16 %v190
    %v236 = vunpack.c.l.b16 %v191
    %v237 = vunpack.c.h.b16 %v191
    %v238 = vunpack.c.l.b16 %v192
    %v239 = vunpack.c.h.b16 %v192
    %v240 = vunpack.c.l.b16 %v193
    %v241 = vunpack.c.h.b16 %v193
    %v242 = vunpack.c.l.b16 %v194
    %v243 = vunpack.c.h.b16 %v194
    %v244 = vunpack.c.l.b16 %v195
    %v245 = vunpack.c.h.b16 %v195
    %v246 = vunpack.c.l.b16 %v196
    %v247 = vunpack.c.h.b16 %v196
    %v248 = vunpack.c.l.b16 %v197
    %v249 = vunpack.c.h.b16 %v197
    %v250 = vunpack.c.l.b16 %v198
    %v251 = vunpack.c.h.b16 %v198
    %v252 = vunpack.c.l.b16 %v199
    %v253 = vunpack.c.h.b16 %v199
    %v254 = vunpack.c.l.b16 %v200
    %v255 = vunpack.c.h.b16 %v200
    %v256 = vunpack.c.l.b16 %v201
    %v257 = vunpack.c.h.b16 %v201
    %v258 = vunpack.c.l.b16 %v202
    %v259 = vunpack.c.h.b16 %v202
    %v260 = vunpack.c.l.b16 %v203
    %v261 = vunpack.c.h.b16 %v203
    %v262 = vpack.c.b16 %v232, %v230
    %v263 = vpack.c.b16 %v233, %v231
    %v264 = vpack.c.b16 %v236, %v234
    %v265 = vpack.c.b16 %v237, %v235
    %v266 = vpack.c.b16 %v240, %v238
    %v267 = vpack.c.b16 %v241, %v239
    %v268 = vpack.c.b16 %v244, %v242
    %v269 = vpack.c.b16 %v245, %v243
    %v270 = vpack.c.b16 %v248, %v246
    %v271 = vpack.c.b16 %v249, %v247
    %v272 = vpack.c.b16 %v252, %v250
    %v273 = vpack.c.b16 %v253, %v251
    %v274 = vpack.c.b16 %v256, %v254
    %v275 = vpack.c.b16 %v257, %v255
    %v276 = vpack.c.b16 %v260, %v258
    %v277 = vpack.c.b16 %v261, %v259
    %294 = vmatprep.subr.bf16.mxu0 %v263
    %295 = vmatpush1.bf16.msra.mxu0 %v262
    %296 = vmatprep.subr.bf16.mxu0 %v265
    %297 = vmatpush1.bf16.msra.mxu0 %v264
    %298 = vmatprep.subr.bf16.mxu0 %v267
    %299 = vmatpush1.bf16.msra.mxu0 %v266
    %300 = vmatprep.subr.bf16.mxu0 %v269
    %301 = vmatpush1.bf16.msra.mxu0 %v268
    %302 = vmatprep.subr.bf16.mxu0 %v271
    %303 = vmatpush1.bf16.msra.mxu0 %v270
    %304 = vmatprep.subr.bf16.mxu0 %v273
    %305 = vmatpush1.bf16.msra.mxu0 %v272
    %306 = vmatprep.subr.bf16.mxu0 %v275
    %307 = vmatpush1.bf16.msra.mxu0 %v274
    %308 = vmatprep.subr.bf16.mxu0 %v277
    %309 = vmatpush1.bf16.msra.mxu0 %v276
    %310 = vmatprep.subr.bf16.mxu0 0
    %311 = vmatpush1.bf16.msra.mxu0 0
    %312 = vmatprep.subr.bf16.mxu0 0
    %313 = vmatpush1.bf16.msra.mxu0 0
    %314 = vmatprep.subr.bf16.mxu0 0
    %315 = vmatpush1.bf16.msra.mxu0 0
    %316 = vmatprep.subr.bf16.mxu0 0
    %317 = vmatpush1.bf16.msra.mxu0 0
    %318 = vmatprep.subr.bf16.mxu0 0
    %319 = vmatpush1.bf16.msra.mxu0 0
    %320 = vmatprep.subr.bf16.mxu0 0
    %321 = vmatpush1.bf16.msra.mxu0 0
    %322 = vmatprep.subr.bf16.mxu0 0
    %323 = vmatpush1.bf16.msra.mxu0 0
    %324 = vmatprep.subr.bf16.mxu0 0
    %325 = vmatpush1.bf16.msra.mxu0 0
    %326 = vmatprep.mubr.bf16.mxu0 0
    %327 = vmatmul.mubr.bf16.gmra.mrb[0].mxu0 0
    %v328 = vpop.f32.mrb[0].mxu0
    %v329 = vadd.f32 0.0, %v328
    %v330 = vpop.f32.mrb[0].mxu0
    %v331 = vadd.f32 0.0, %v330
    %v332 = vpop.f32.mrb[0].mxu0
    %v333 = vpop.f32.mrb[0].mxu0
    %334 = vdwg.mxu0
    %v335 = vadd.f32 %v150, %v329
    %v336 = vadd.f32 %v152, %v331
    %v337 = vtanh.pop %v335
    %v338 = vtanh.pop %v336
    %v339 = vmul.f32 %v337, 0.5
    %v340 = vmul.f32 %v338, 0.5
    %v341 = vadd.f32 %v339, 0.5
    %v342 = vadd.f32 %v340, 0.5
    %v343 = vsel %vm211, %v337, %v341
    %v344 = vsel %vm212, %v338, %v342
    %345 = vrot.lane.b32.xlu0 %v343, 64
    %v346 = vpop.permute.xlu0 %345
    %v347 = vmul.f32 %v343, %v344
    %v348 = vmul.f32 %v346, 0.0
    %v349 = vadd.f32 %v347, %v348
    %v350 = vtanh.pop %v349
    %351 = vrot.lane.b32.xlu0 %v350, 64
    %v352 = vpop.permute.xlu0 %351
    %v353 = vmul.f32 %v344, %v352
    %v354 = vsel %vm213, %v349, %v353
    %v355 = vpack.c.bf16 %v354, %v354
    %356 = vmatprep.subr.bf16.mxu0 %v263
    %357 = vmatpush1.bf16.msra.mxu0 %v262
    %358 = vmatprep.subr.bf16.mxu0 %v265
    %359 = vmatpush1.bf16.msra.mxu0 %v264
    %360 = vmatprep.subr.bf16.mxu0 %v267
    %361 = vmatpush1.bf16.msra.mxu0 %v266
    %362 = vmatprep.subr.bf16.mxu0 %v269
    %363 = vmatpush1.bf16.msra.mxu0 %v268
    %364 = vmatprep.subr.bf16.mxu0 %v271
    %365 = vmatpush1.bf16.msra.mxu0 %v270
    %366 = vmatprep.subr.bf16.mxu0 %v273
    %367 = vmatpush1.bf16.msra.mxu0 %v272
    %368 = vmatprep.subr.bf16.mxu0 %v275
    %369 = vmatpush1.bf16.msra.mxu0 %v274
    %370 = vmatprep.subr.bf16.mxu0 %v277
    %371 = vmatpush1.bf16.msra.mxu0 %v276
    %372 = vmatprep.subr.bf16.mxu0 0
    %373 = vmatpush1.bf16.msra.mxu0 0
    %374 = vmatprep.subr.bf16.mxu0 0
    %375 = vmatpush1.bf16.msra.mxu0 0
    %376 = vmatprep.subr.bf16.mxu0 0
    %377 = vmatpush1.bf16.msra.mxu0 0
    %378 = vmatprep.subr.bf16.mxu0 0
    %379 = vmatpush1.bf16.msra.mxu0 0
    %380 = vmatprep.subr.bf16.mxu0 0
    %381 = vmatpush1.bf16.msra.mxu0 0
    %382 = vmatprep.subr.bf16.mxu0 0
    %383 = vmatpush1.bf16.msra.mxu0 0
    %384 = vmatprep.subr.bf16.mxu0 0
    %385 = vmatpush1.bf16.msra.mxu0 0
    %386 = vmatprep.subr.bf16.mxu0 0
    %387 = vmatpush1.bf16.msra.mxu0 0
    %388 = vmatprep.mubr.bf16.mxu0 0
    %389 = vmatmul.mubr.bf16.gmra.mrb[0].mxu0 %v355
    %v390 = vpop.f32.mrb[0].mxu0
    %v391 = vadd.f32 0.0, %v390
    %v392 = vpop.f32.mrb[0].mxu0
    %v393 = vadd.f32 0.0, %v392
    %v394 = vpop.f32.mrb[0].mxu0
    %v395 = vpop.f32.mrb[0].mxu0
    %396 = vdwg.mxu0
    %v397 = vadd.f32 %v154, %v391
    %v398 = vadd.f32 %v156, %v393
    %v399 = vtanh.pop %v397
    %v400 = vtanh.pop %v398
    %v401 = vmul.f32 %v399, 0.5
    %v402 = vmul.f32 %v400, 0.5
    %v403 = vadd.f32 %v401, 0.5
    %v404 = vadd.f32 %v402, 0.5
    %v405 = vsel %vm211, %v399, %v403
    %v406 = vsel %vm212, %v400, %v404
    %407 = vrot.lane.b32.xlu0 %v405, 64
    %v408 = vpop.permute.xlu0 %407
    %v409 = vmul.f32 %v405, %v406
    %v410 = vmul.f32 %v408, %v354
    %v411 = vadd.f32 %v409, %v410
    %v412 = vtanh.pop %v411
    %413 = vrot.lane.b32.xlu0 %v412, 64
    %v414 = vpop.permute.xlu0 %413
    %v415 = vmul.f32 %v406, %v414
    %v416 = vsel %vm213, %v411, %v415
    %v417 = vmax.f32 %v354, %v416
    %v418 = vpack.c.bf16 %v416, %v416
    %419 = vmatprep.subr.bf16.mxu0 %v263
    %420 = vmatpush1.bf16.msra.mxu0 %v262
    %421 = vmatprep.subr.bf16.mxu0 %v265
    %422 = vmatpush1.bf16.msra.mxu0 %v264
    %423 = vmatprep.subr.bf16.mxu0 %v267
    %424 = vmatpush1.bf16.msra.mxu0 %v266
    %425 = vmatprep.subr.bf16.mxu0 %v269
    %426 = vmatpush1.bf16.msra.mxu0 %v268
    %427 = vmatprep.subr.bf16.mxu0 %v271
    %428 = vmatpush1.bf16.msra.mxu0 %v270
    %429 = vmatprep.subr.bf16.mxu0 %v273
    %430 = vmatpush1.bf16.msra.mxu0 %v272
    %431 = vmatprep.subr.bf16.mxu0 %v275
    %432 = vmatpush1.bf16.msra.mxu0 %v274
    %433 = vmatprep.subr.bf16.mxu0 %v277
    %434 = vmatpush1.bf16.msra.mxu0 %v276
    %435 = vmatprep.subr.bf16.mxu0 0
    %436 = vmatpush1.bf16.msra.mxu0 0
    %437 = vmatprep.subr.bf16.mxu0 0
    %438 = vmatpush1.bf16.msra.mxu0 0
    %439 = vmatprep.subr.bf16.mxu0 0
    %440 = vmatpush1.bf16.msra.mxu0 0
    %441 = vmatprep.subr.bf16.mxu0 0
    %442 = vmatpush1.bf16.msra.mxu0 0
    %443 = vmatprep.subr.bf16.mxu0 0
    %444 = vmatpush1.bf16.msra.mxu0 0
    %445 = vmatprep.subr.bf16.mxu0 0
    %446 = vmatpush1.bf16.msra.mxu0 0
    %447 = vmatprep.subr.bf16.mxu0 0
    %448 = vmatpush1.bf16.msra.mxu0 0
    %449 = vmatprep.subr.bf16.mxu0 0
    %450 = vmatpush1.bf16.msra.mxu0 0
    %451 = vmatprep.mubr.bf16.mxu0 0
    %452 = vmatmul.mubr.bf16.gmra.mrb[0].mxu0 %v418
    %v453 = vpop.f32.mrb[0].mxu0
    %v454 = vadd.f32 0.0, %v453
    %v455 = vpop.f32.mrb[0].mxu0
    %v456 = vadd.f32 0.0, %v455
    %v457 = vpop.f32.mrb[0].mxu0
    %v458 = vpop.f32.mrb[0].mxu0
    %459 = vdwg.mxu0
    %v460 = vadd.f32 %v160, %v454
    %v461 = vadd.f32 %v162, %v456
    %v462 = vtanh.pop %v460
    %v463 = vtanh.pop %v461
    %v464 = vmul.f32 %v462, 0.5
    %v465 = vmul.f32 %v463, 0.5
    %v466 = vadd.f32 %v464, 0.5
    %v467 = vadd.f32 %v465, 0.5
    %v468 = vsel %vm211, %v462, %v466
    %v469 = vsel %vm212, %v463, %v467
    %470 = vrot.lane.b32.xlu0 %v468, 64
    %v471 = vpop.permute.xlu0 %470
    %v472 = vmul.f32 %v468, %v469
    %v473 = vmul.f32 %v471, %v416
    %v474 = vadd.f32 %v472, %v473
    %v475 = vtanh.pop %v474
    %476 = vrot.lane.b32.xlu0 %v475, 64
    %v477 = vpop.permute.xlu0 %476
    %v478 = vmul.f32 %v469, %v477
    %v479 = vsel %vm213, %v474, %v478
    %v480 = vmax.f32 %v417, %v479
    %v481 = vpack.c.bf16 %v479, %v479
    %482 = vmatprep.subr.bf16.mxu0 %v263
    %483 = vmatpush1.bf16.msra.mxu0 %v262
    %484 = vmatprep.subr.bf16.mxu0 %v265
    %485 = vmatpush1.bf16.msra.mxu0 %v264
    %486 = vmatprep.subr.bf16.mxu0 %v267
    %487 = vmatpush1.bf16.msra.mxu0 %v266
    %488 = vmatprep.subr.bf16.mxu0 %v269
    %489 = vmatpush1.bf16.msra.mxu0 %v268
    %490 = vmatprep.subr.bf16.mxu0 %v271
    %491 = vmatpush1.bf16.msra.mxu0 %v270
    %492 = vmatprep.subr.bf16.mxu0 %v273
    %493 = vmatpush1.bf16.msra.mxu0 %v272
    %494 = vmatprep.subr.bf16.mxu0 %v275
    %495 = vmatpush1.bf16.msra.mxu0 %v274
    %496 = vmatprep.subr.bf16.mxu0 %v277
    %497 = vmatpush1.bf16.msra.mxu0 %v276
    %498 = vmatprep.subr.bf16.mxu0 0
    %499 = vmatpush1.bf16.msra.mxu0 0
    %500 = vmatprep.subr.bf16.mxu0 0
    %501 = vmatpush1.bf16.msra.mxu0 0
    %502 = vmatprep.subr.bf16.mxu0 0
    %503 = vmatpush1.bf16.msra.mxu0 0
    %504 = vmatprep.subr.bf16.mxu0 0
    %505 = vmatpush1.bf16.msra.mxu0 0
    %506 = vmatprep.subr.bf16.mxu0 0
    %507 = vmatpush1.bf16.msra.mxu0 0
    %508 = vmatprep.subr.bf16.mxu0 0
    %509 = vmatpush1.bf16.msra.mxu0 0
    %510 = vmatprep.subr.bf16.mxu0 0
    %511 = vmatpush1.bf16.msra.mxu0 0
    %512 = vmatprep.subr.bf16.mxu0 0
    %513 = vmatpush1.bf16.msra.mxu0 0
    %514 = vmatprep.mubr.bf16.mxu0 0
    %515 = vmatmul.mubr.bf16.gmra.mrb[0].mxu0 %v481
    %v516 = vpop.f32.mrb[0].mxu0
    %v517 = vadd.f32 0.0, %v516
    %v518 = vpop.f32.mrb[0].mxu0
    %v519 = vadd.f32 0.0, %v518
    %v520 = vpop.f32.mrb[0].mxu0
    %v521 = vpop.f32.mrb[0].mxu0
    %522 = vdwg.mxu0
    %v523 = vadd.f32 %v164, %v517
    %v524 = vadd.f32 %v166, %v519
    %v525 = vtanh.pop %v523
    %v526 = vtanh.pop %v524
    %v527 = vmul.f32 %v525, 0.5
    %v528 = vmul.f32 %v526, 0.5
    %v529 = vadd.f32 %v527, 0.5
    %v530 = vadd.f32 %v528, 0.5
    %v531 = vsel %vm211, %v525, %v529
    %v532 = vsel %vm212, %v526, %v530
    %533 = vrot.lane.b32.xlu0 %v531, 64
    %v534 = vpop.permute.xlu0 %533
    %v535 = vmul.f32 %v531, %v532
    %v536 = vmul.f32 %v534, %v479
    %v537 = vadd.f32 %v535, %v536
    %v538 = vtanh.pop %v537
    %539 = vrot.lane.b32.xlu0 %v538, 64
    %v540 = vpop.permute.xlu0 %539
    %v541 = vmul.f32 %v532, %v540
    %v542 = vsel %vm213, %v537, %v541
    %v543 = vmax.f32 %v480, %v542
    %v544 = vpack.c.bf16 %v542, %v542
    %545 = vmatprep.subr.bf16.mxu0 %v263
    %546 = vmatpush1.bf16.msra.mxu0 %v262
    %547 = vmatprep.subr.bf16.mxu0 %v265
    %548 = vmatpush1.bf16.msra.mxu0 %v264
    %549 = vmatprep.subr.bf16.mxu0 %v267
    %550 = vmatpush1.bf16.msra.mxu0 %v266
    %551 = vmatprep.subr.bf16.mxu0 %v269
    %552 = vmatpush1.bf16.msra.mxu0 %v268
    %553 = vmatprep.subr.bf16.mxu0 %v271
    %554 = vmatpush1.bf16.msra.mxu0 %v270
    %555 = vmatprep.subr.bf16.mxu0 %v273
    %556 = vmatpush1.bf16.msra.mxu0 %v272
    %557 = vmatprep.subr.bf16.mxu0 %v275
    %558 = vmatpush1.bf16.msra.mxu0 %v274
    %559 = vmatprep.subr.bf16.mxu0 %v277
    %560 = vmatpush1.bf16.msra.mxu0 %v276
    %561 = vmatprep.subr.bf16.mxu0 0
    %562 = vmatpush1.bf16.msra.mxu0 0
    %563 = vmatprep.subr.bf16.mxu0 0
    %564 = vmatpush1.bf16.msra.mxu0 0
    %565 = vmatprep.subr.bf16.mxu0 0
    %566 = vmatpush1.bf16.msra.mxu0 0
    %567 = vmatprep.subr.bf16.mxu0 0
    %568 = vmatpush1.bf16.msra.mxu0 0
    %569 = vmatprep.subr.bf16.mxu0 0
    %570 = vmatpush1.bf16.msra.mxu0 0
    %571 = vmatprep.subr.bf16.mxu0 0
    %572 = vmatpush1.bf16.msra.mxu0 0
    %573 = vmatprep.subr.bf16.mxu0 0
    %574 = vmatpush1.bf16.msra.mxu0 0
    %575 = vmatprep.subr.bf16.mxu0 0
    %576 = vmatpush1.bf16.msra.mxu0 0
    %577 = vmatprep.mubr.bf16.mxu0 0
    %578 = vmatmul.mubr.bf16.gmra.mrb[0].mxu0 %v544
    %v579 = vpop.f32.mrb[0].mxu0
    %v580 = vadd.f32 0.0, %v579
    %v581 = vpop.f32.mrb[0].mxu0
    %v582 = vadd.f32 0.0, %v581
    %v583 = vpop.f32.mrb[0].mxu0
    %v584 = vpop.f32.mrb[0].mxu0
    %585 = vdwg.mxu0
    %v586 = vadd.f32 %v170, %v580
    %v587 = vadd.f32 %v172, %v582
    %v588 = vtanh.pop %v586
    %v589 = vtanh.pop %v587
    %v590 = vmul.f32 %v588, 0.5
    %v591 = vmul.f32 %v589, 0.5
    %v592 = vadd.f32 %v590, 0.5
    %v593 = vadd.f32 %v591, 0.5
    %v594 = vsel %vm211, %v588, %v592
    %v595 = vsel %vm212, %v589, %v593
    %596 = vrot.lane.b32.xlu0 %v594, 64
    %v597 = vpop.permute.xlu0 %596
    %v598 = vmul.f32 %v594, %v595
    %v599 = vmul.f32 %v597, %v542
    %v600 = vadd.f32 %v598, %v599
    %v601 = vtanh.pop %v600
    %602 = vrot.lane.b32.xlu0 %v601, 64
    %v603 = vpop.permute.xlu0 %602
    %v604 = vmul.f32 %v595, %v603
    %v605 = vsel %vm213, %v600, %v604
    %v606 = vmax.f32 %v543, %v605
    %v607 = vpack.c.bf16 %v605, %v605
    %608 = vmatprep.subr.bf16.mxu0 %v263
    %609 = vmatpush1.bf16.msra.mxu0 %v262
    %610 = vmatprep.subr.bf16.mxu0 %v265
    %611 = vmatpush1.bf16.msra.mxu0 %v264
    %612 = vmatprep.subr.bf16.mxu0 %v267
    %613 = vmatpush1.bf16.msra.mxu0 %v266
    %614 = vmatprep.subr.bf16.mxu0 %v269
    %615 = vmatpush1.bf16.msra.mxu0 %v268
    %616 = vmatprep.subr.bf16.mxu0 %v271
    %617 = vmatpush1.bf16.msra.mxu0 %v270
    %618 = vmatprep.subr.bf16.mxu0 %v273
    %619 = vmatpush1.bf16.msra.mxu0 %v272
    %620 = vmatprep.subr.bf16.mxu0 %v275
    %621 = vmatpush1.bf16.msra.mxu0 %v274
    %622 = vmatprep.subr.bf16.mxu0 %v277
    %623 = vmatpush1.bf16.msra.mxu0 %v276
    %624 = vmatprep.subr.bf16.mxu0 0
    %625 = vmatpush1.bf16.msra.mxu0 0
    %626 = vmatprep.subr.bf16.mxu0 0
    %627 = vmatpush1.bf16.msra.mxu0 0
    %628 = vmatprep.subr.bf16.mxu0 0
    %629 = vmatpush1.bf16.msra.mxu0 0
    %630 = vmatprep.subr.bf16.mxu0 0
    %631 = vmatpush1.bf16.msra.mxu0 0
    %632 = vmatprep.subr.bf16.mxu0 0
    %633 = vmatpush1.bf16.msra.mxu0 0
    %634 = vmatprep.subr.bf16.mxu0 0
    %635 = vmatpush1.bf16.msra.mxu0 0
    %636 = vmatprep.subr.bf16.mxu0 0
    %637 = vmatpush1.bf16.msra.mxu0 0
    %638 = vmatprep.subr.bf16.mxu0 0
    %639 = vmatpush1.bf16.msra.mxu0 0
    %640 = vmatprep.mubr.bf16.mxu0 0
    %641 = vmatmul.mubr.bf16.gmra.mrb[0].mxu0 %v607
    %v642 = vpop.f32.mrb[0].mxu0
    %v643 = vadd.f32 0.0, %v642
    %v644 = vpop.f32.mrb[0].mxu0
    %v645 = vadd.f32 0.0, %v644
    %v646 = vpop.f32.mrb[0].mxu0
    %v647 = vpop.f32.mrb[0].mxu0
    %648 = vdwg.mxu0
    %v649 = vadd.f32 %v174, %v643
    %v650 = vadd.f32 %v176, %v645
    %v651 = vtanh.pop %v649
    %v652 = vtanh.pop %v650
    %v653 = vmul.f32 %v651, 0.5
    %v654 = vmul.f32 %v652, 0.5
    %v655 = vadd.f32 %v653, 0.5
    %v656 = vadd.f32 %v654, 0.5
    %v657 = vsel %vm211, %v651, %v655
    %v658 = vsel %vm212, %v652, %v656
    %659 = vrot.lane.b32.xlu0 %v657, 64
    %v660 = vpop.permute.xlu0 %659
    %v661 = vmul.f32 %v657, %v658
    %v662 = vmul.f32 %v660, %v605
    %v663 = vadd.f32 %v661, %v662
    %v664 = vtanh.pop %v663
    %665 = vrot.lane.b32.xlu0 %v664, 64
    %v666 = vpop.permute.xlu0 %665
    %v667 = vmul.f32 %v658, %v666
    %v668 = vsel %vm213, %v663, %v667
    %v669 = vmax.f32 %v606, %v668
    %v670 = vpack.c.bf16 %v668, %v668
    %671 = vmatprep.subr.bf16.mxu0 %v263
    %672 = vmatpush1.bf16.msra.mxu0 %v262
    %673 = vmatprep.subr.bf16.mxu0 %v265
    %674 = vmatpush1.bf16.msra.mxu0 %v264
    %675 = vmatprep.subr.bf16.mxu0 %v267
    %676 = vmatpush1.bf16.msra.mxu0 %v266
    %677 = vmatprep.subr.bf16.mxu0 %v269
    %678 = vmatpush1.bf16.msra.mxu0 %v268
    %679 = vmatprep.subr.bf16.mxu0 %v271
    %680 = vmatpush1.bf16.msra.mxu0 %v270
    %681 = vmatprep.subr.bf16.mxu0 %v273
    %682 = vmatpush1.bf16.msra.mxu0 %v272
    %683 = vmatprep.subr.bf16.mxu0 %v275
    %684 = vmatpush1.bf16.msra.mxu0 %v274
    %685 = vmatprep.subr.bf16.mxu0 %v277
    %686 = vmatpush1.bf16.msra.mxu0 %v276
    %687 = vmatprep.subr.bf16.mxu0 0
    %688 = vmatpush1.bf16.msra.mxu0 0
    %689 = vmatprep.subr.bf16.mxu0 0
    %690 = vmatpush1.bf16.msra.mxu0 0
    %691 = vmatprep.subr.bf16.mxu0 0
    %692 = vmatpush1.bf16.msra.mxu0 0
    %693 = vmatprep.subr.bf16.mxu0 0
    %694 = vmatpush1.bf16.msra.mxu0 0
    %695 = vmatprep.subr.bf16.mxu0 0
    %696 = vmatpush1.bf16.msra.mxu0 0
    %697 = vmatprep.subr.bf16.mxu0 0
    %698 = vmatpush1.bf16.msra.mxu0 0
    %699 = vmatprep.subr.bf16.mxu0 0
    %700 = vmatpush1.bf16.msra.mxu0 0
    %701 = vmatprep.subr.bf16.mxu0 0
    %702 = vmatpush1.bf16.msra.mxu0 0
    %703 = vmatprep.mubr.bf16.mxu0 0
    %704 = vmatmul.mubr.bf16.gmra.mrb[0].mxu0 %v670
    %v705 = vpop.f32.mrb[0].mxu0
    %v706 = vadd.f32 0.0, %v705
    %v707 = vpop.f32.mrb[0].mxu0
    %v708 = vadd.f32 0.0, %v707
    %v709 = vpop.f32.mrb[0].mxu0
    %v710 = vpop.f32.mrb[0].mxu0
    %711 = vdwg.mxu0
    %v712 = vadd.f32 %v180, %v706
    %v713 = vadd.f32 %v182, %v708
    %v714 = vtanh.pop %v712
    %v715 = vtanh.pop %v713
    %v716 = vmul.f32 %v714, 0.5
    %v717 = vmul.f32 %v715, 0.5
    %v718 = vadd.f32 %v716, 0.5
    %v719 = vadd.f32 %v717, 0.5
    %v720 = vsel %vm211, %v714, %v718
    %v721 = vsel %vm212, %v715, %v719
    %722 = vrot.lane.b32.xlu0 %v720, 64
    %v723 = vpop.permute.xlu0 %722
    %v724 = vmul.f32 %v720, %v721
    %v725 = vmul.f32 %v723, %v668
    %v726 = vadd.f32 %v724, %v725
    %v727 = vtanh.pop %v726
    %728 = vrot.lane.b32.xlu0 %v727, 64
    %v729 = vpop.permute.xlu0 %728
    %v730 = vmul.f32 %v721, %v729
    %v731 = vsel %vm213, %v726, %v730
    %v732 = vmax.f32 %v669, %v731
    %v733 = vpack.c.bf16 %v731, %v731
    %734 = vmatprep.subr.bf16.mxu0 %v263
    %735 = vmatpush1.bf16.msra.mxu0 %v262
    %736 = vmatprep.subr.bf16.mxu0 %v265
    %737 = vmatpush1.bf16.msra.mxu0 %v264
    %738 = vmatprep.subr.bf16.mxu0 %v267
    %739 = vmatpush1.bf16.msra.mxu0 %v266
    %740 = vmatprep.subr.bf16.mxu0 %v269
    %741 = vmatpush1.bf16.msra.mxu0 %v268
    %742 = vmatprep.subr.bf16.mxu0 %v271
    %743 = vmatpush1.bf16.msra.mxu0 %v270
    %744 = vmatprep.subr.bf16.mxu0 %v273
    %745 = vmatpush1.bf16.msra.mxu0 %v272
    %746 = vmatprep.subr.bf16.mxu0 %v275
    %747 = vmatpush1.bf16.msra.mxu0 %v274
    %748 = vmatprep.subr.bf16.mxu0 %v277
    %749 = vmatpush1.bf16.msra.mxu0 %v276
    %750 = vmatprep.subr.bf16.mxu0 0
    %751 = vmatpush1.bf16.msra.mxu0 0
    %752 = vmatprep.subr.bf16.mxu0 0
    %753 = vmatpush1.bf16.msra.mxu0 0
    %754 = vmatprep.subr.bf16.mxu0 0
    %755 = vmatpush1.bf16.msra.mxu0 0
    %756 = vmatprep.subr.bf16.mxu0 0
    %757 = vmatpush1.bf16.msra.mxu0 0
    %758 = vmatprep.subr.bf16.mxu0 0
    %759 = vmatpush1.bf16.msra.mxu0 0
    %760 = vmatprep.subr.bf16.mxu0 0
    %761 = vmatpush1.bf16.msra.mxu0 0
    %762 = vmatprep.subr.bf16.mxu0 0
    %763 = vmatpush1.bf16.msra.mxu0 0
    %764 = vmatprep.subr.bf16.mxu0 0
    %765 = vmatpush1.bf16.msra.mxu0 0
    %766 = vmatprep.mubr.bf16.mxu0 0
    %767 = vmatmul.mubr.bf16.gmra.mrb[0].mxu0 %v733
    %v768 = vpop.f32.mrb[0].mxu0
    %v769 = vadd.f32 0.0, %v768
    %v770 = vpop.f32.mrb[0].mxu0
    %v771 = vadd.f32 0.0, %v770
    %v772 = vpop.f32.mrb[0].mxu0
    %v773 = vpop.f32.mrb[0].mxu0
    %774 = vdwg.mxu0
    %v775 = vadd.f32 %v184, %v769
    %v776 = vadd.f32 %v186, %v771
    %v777 = vtanh.pop %v775
    %v778 = vtanh.pop %v776
    %v779 = vmul.f32 %v777, 0.5
    %v780 = vmul.f32 %v778, 0.5
    %v781 = vadd.f32 %v779, 0.5
    %v782 = vadd.f32 %v780, 0.5
    %v783 = vsel %vm211, %v777, %v781
    %v784 = vsel %vm212, %v778, %v782
    %785 = vrot.lane.b32.xlu0 %v783, 64
    %v786 = vpop.permute.xlu0 %785
    %v787 = vmul.f32 %v783, %v784
    %v788 = vmul.f32 %v786, %v731
    %v789 = vadd.f32 %v787, %v788
    %v790 = vtanh.pop %v789
    %791 = vrot.lane.b32.xlu0 %v790, 64
    %v792 = vpop.permute.xlu0 %791
    %v793 = vmul.f32 %v784, %v792
    %v794 = vsel %vm213, %v789, %v793
    %v795 = vmax.f32 %v732, %v794
    %v796 = vtanh.pop %v795
    %v797 = vtanh.pop %v796
    %v798 = vpack.c.bf16 %v797, %v797
    %v799 = vld [vmem:[%s4] sm:$0xf]
    %v800 = vld [vmem:[%s4 + $0x4] sm:$0xf]
    %v801 = vld [vmem:[%s4 + $0x8] sm:$0xf]
    %v802 = vld [vmem:[%s4 + $0xc] sm:$0xf]
    %v803 = vld [vmem:[%s4 + $0x10] sm:$0xf]
    %v804 = vld [vmem:[%s4 + $0x14] sm:$0xf]
    %v805 = vld [vmem:[%s4 + $0x18] sm:$0xf]
    %v806 = vld [vmem:[%s4 + $0x1c] sm:$0xf]
    %v807 = vld [vmem:[%s4 + $0x20] sm:$0xf]
    %v808 = vld [vmem:[%s4 + $0x24] sm:$0xf]
    %v809 = vld [vmem:[%s4 + $0x28] sm:$0xf]
    %v810 = vld [vmem:[%s4 + $0x2c] sm:$0xf]
    %v811 = vld [vmem:[%s4 + $0x30] sm:$0xf]
    %v812 = vld [vmem:[%s4 + $0x34] sm:$0xf]
    %v813 = vld [vmem:[%s4 + $0x38] sm:$0xf]
    %v814 = vld [vmem:[%s4 + $0x3c] sm:$0xf]
    %v815 = vld [vmem:[%s5] sm:$0x1]
    %v817 = vlaneseq
    %v818 = vshrl.u32 %v817, 7
    %v819 = vsub.s32 0, %v818
    %v820 = vrot.slane %v815, %v819
    %v838 = vunpack.c.l.b16 %v799
    %v839 = vunpack.c.l.b16 %v800
    %v840 = vunpack.c.l.b16 %v801
    %v841 = vunpack.c.l.b16 %v802
    %v842 = vunpack.c.l.b16 %v803
    %v843 = vunpack.c.l.b16 %v804
    %v844 = vunpack.c.l.b16 %v805
    %v845 = vunpack.c.l.b16 %v806
    %v846 = vunpack.c.l.b16 %v807
    %v847 = vunpack.c.l.b16 %v808
    %v848 = vunpack.c.l.b16 %v809
    %v849 = vunpack.c.l.b16 %v810
    %v850 = vunpack.c.l.b16 %v811
    %v851 = vunpack.c.l.b16 %v812
    %v852 = vunpack.c.l.b16 %v813
    %v853 = vunpack.c.l.b16 %v814
    %v854 = vpack.c.b16 %v839, %v838
    %v855 = vpack.c.b16 %v841, %v840
    %v856 = vpack.c.b16 %v843, %v842
    %v857 = vpack.c.b16 %v845, %v844
    %v858 = vpack.c.b16 %v847, %v846
    %v859 = vpack.c.b16 %v849, %v848
    %v860 = vpack.c.b16 %v851, %v850
    %v861 = vpack.c.b16 %v853, %v852
    %870 = vmatprep.subr.bf16.mxu0 0
    %871 = vmatpush1.bf16.msra.mxu0 %v854
    %872 = vmatprep.subr.bf16.mxu0 0
    %873 = vmatpush1.bf16.msra.mxu0 %v855
    %874 = vmatprep.subr.bf16.mxu0 0
    %875 = vmatpush1.bf16.msra.mxu0 %v856
    %876 = vmatprep.subr.bf16.mxu0 0
    %877 = vmatpush1.bf16.msra.mxu0 %v857
    %878 = vmatprep.subr.bf16.mxu0 0
    %879 = vmatpush1.bf16.msra.mxu0 %v858
    %880 = vmatprep.subr.bf16.mxu0 0
    %881 = vmatpush1.bf16.msra.mxu0 %v859
    %882 = vmatprep.subr.bf16.mxu0 0
    %883 = vmatpush1.bf16.msra.mxu0 %v860
    %884 = vmatprep.subr.bf16.mxu0 0
    %885 = vmatpush1.bf16.msra.mxu0 %v861
    %886 = vmatprep.subr.bf16.mxu0 0
    %887 = vmatpush1.bf16.msra.mxu0 0
    %888 = vmatprep.subr.bf16.mxu0 0
    %889 = vmatpush1.bf16.msra.mxu0 0
    %890 = vmatprep.subr.bf16.mxu0 0
    %891 = vmatpush1.bf16.msra.mxu0 0
    %892 = vmatprep.subr.bf16.mxu0 0
    %893 = vmatpush1.bf16.msra.mxu0 0
    %894 = vmatprep.subr.bf16.mxu0 0
    %895 = vmatpush1.bf16.msra.mxu0 0
    %896 = vmatprep.subr.bf16.mxu0 0
    %897 = vmatpush1.bf16.msra.mxu0 0
    %898 = vmatprep.subr.bf16.mxu0 0
    %899 = vmatpush1.bf16.msra.mxu0 0
    %900 = vmatprep.subr.bf16.mxu0 0
    %901 = vmatpush1.bf16.msra.mxu0 0
    %902 = vmatprep.mubr.bf16.mxu0 0
    %903 = vmatmul.mubr.bf16.gmra.mrb[0].mxu0 %v798
    %v904 = vpop.f32.mrb[0].mxu0
    %v905 = vadd.f32 %v820, %v904
    %v906 = vpop.f32.mrb[0].mxu0
    %v907 = vpop.f32.mrb[0].mxu0
    %v908 = vpop.f32.mrb[0].mxu0
    %909 = vdwg.mxu0
    %vm910 = vcmask 31744
    %911 = vst.msk [vmem:[%s6] sm:$0xff] %vm910, %v905
    // Predicated region
    $region30: #{tpu_custom_call.1} parent=1 // pred_check
      _
    $region31: #{tpu_custom_call.1} parent=1 // pred_check_branch
      %913 = sbr.rel (0) target = $region33
    $region32: #{tpu_custom_call.1} parent=1 // pred_region
      _
    $region33: #{tpu_custom_call.1} parent=1 // pred_fallthru
      _
    // Predicated region
    $region34: #{tpu_custom_call.1} parent=1 // pred_check
      _
    $region35: #{tpu_custom_call.1} parent=1 // pred_check_branch
      %915 = sbr.rel (0) target = $region37
    $region36: #{tpu_custom_call.1} parent=1 // pred_region
      _
    $region37: #{tpu_custom_call.1} parent=1 // pred_fallthru
      _
    %916 = vsyncpa [#allocation3], 1

</llo_original>
